<compile_context>
chip_gen: v7x
topology: tpu7x:2x2x1
jax: 0.10.0
libtpu: 0.0.40
codegen_flags: <defaults>
</compile_context>

<pallas_src>
import math
import numpy as np
import jax
import jax.numpy as jnp
from jax.experimental import pallas as pl
from jax.experimental.pallas import tpu as pltpu

INPUT_SIZE = 46
HIDDEN_SIZE = 64
NUM_LAYERS = 1          # module uses 1; kernel implements exactly 1 layer
OUTPUT_SIZE = 1


def _lstm_kernel(x_ref, w_ih_ref, w_hh_ref, b_ref, w_fc_ref, b_fc_ref,
                 out_ref, xw_sc):
    S, B, I = x_ref.shape
    H = w_hh_ref.shape[0]

    # ---- hoisted input projection: xw[t] = x[t] @ W_ih + (b_ih + b_hh) ----
    # One big MXU call over all timesteps (no sequential dependence), bf16
    # operands, f32 accumulation, bias added once (not per step).
    x_all = x_ref[...].reshape(S * B, I).astype(jnp.bfloat16)
    xw = jnp.dot(x_all, w_ih_ref[...], preferred_element_type=jnp.float32)
    xw_sc[...] = (xw + b_ref[...]).reshape(S, B, 4 * H)

    w_hh = w_hh_ref[...]          # (H, 4H) bf16, resident across the loop

    def step(t, carry):
        h, c = carry
        z = xw_sc[t] + jnp.dot(h.astype(jnp.bfloat16), w_hh,
                               preferred_element_type=jnp.float32)
        # gate columns pre-permuted to [i, f, o, g]:
        # one sigmoid over the first 3H lanes, one tanh over the last H.
        s = jax.nn.sigmoid(z[:, :3 * H])
        i_g = s[:, 0 * H:1 * H]
        f_g = s[:, 1 * H:2 * H]
        o_g = s[:, 2 * H:3 * H]
        g_g = jnp.tanh(z[:, 3 * H:4 * H])
        c_new = f_g * c + i_g * g_g
        h_new = o_g * jnp.tanh(c_new)
        return (h_new, c_new)

    h0 = jnp.zeros((B, H), jnp.float32)   # h0 = c0 = zeros, as in PyTorch forward
    c0 = jnp.zeros((B, H), jnp.float32)
    h_last, _ = jax.lax.fori_loop(0, S, step, (h0, c0), unroll=True)

    # fc(out[:, -1, :]) — tiny (B,H)x(H,O) head, done once, kept in f32.
    out_ref[...] = (jnp.dot(h_last, w_fc_ref[...],
                            preferred_element_type=jnp.float32)
                    + b_fc_ref[...])


def lstm_forward(x, params):
    """x: (batch, seq, input) float32 — same convention as the PyTorch module."""
    w_ih, w_hh, bias, w_fc, b_fc = params
    B, S, I = x.shape
    H = w_hh.shape[0]
    O = w_fc.shape[1]

    # time-major + batch padded to a multiple of 8 (f32 sublane count).
    B_pad = max(8, ((B + 7) // 8) * 8)
    x_tm = jnp.transpose(x, (1, 0, 2))          # (S, B, I)
    if B_pad != B:
        x_tm = jnp.pad(x_tm, ((0, 0), (0, B_pad - B), (0, 0)))

    # reorder gate columns [i, f, g, o] -> [i, f, o, g]; bf16 matmul operands.
    perm = np.concatenate([np.arange(0, 2 * H),
                           np.arange(3 * H, 4 * H),
                           np.arange(2 * H, 3 * H)])
    w_ih_k = w_ih[:, perm].astype(jnp.bfloat16)
    w_hh_k = w_hh[:, perm].astype(jnp.bfloat16)
    bias_k = bias[:, perm]

    out = pl.pallas_call(
        _lstm_kernel,
        out_shape=jax.ShapeDtypeStruct((B_pad, O), jnp.float32),
        grid_spec=pltpu.PrefetchScalarGridSpec(
            num_scalar_prefetch=0,
            grid=(1,),                               # whole problem fits in VMEM
            in_specs=[
                pl.BlockSpec((S, B_pad, I), lambda i: (0, 0, 0)),
                pl.BlockSpec((I, 4 * H), lambda i: (0, 0)),
                pl.BlockSpec((H, 4 * H), lambda i: (0, 0)),
                pl.BlockSpec((1, 4 * H), lambda i: (0, 0)),
                pl.BlockSpec((H, O), lambda i: (0, 0)),
                pl.BlockSpec((1, O), lambda i: (0, 0)),
            ],
            out_specs=pl.BlockSpec((B_pad, O), lambda i: (0, 0)),
            scratch_shapes=[
                pltpu.VMEM((S, B_pad, 4 * H), jnp.float32),   # hoisted x @ W_ih
            ],
        ),
        compiler_params=pltpu.CompilerParams(
            dimension_semantics=("arbitrary",)),
    )(x_tm, w_ih_k, w_hh_k, bias_k, w_fc, b_fc)
    return out[:B]


def init_params(key, input_size, hidden_size, output_size):
    """Deterministic init mimicking nn.LSTM / nn.Linear uniform(-1/sqrt(H), 1/sqrt(H))."""
    k = 1.0 / math.sqrt(hidden_size)
    keys = jax.random.split(key, 6)
    # weights stored pre-transposed for x @ W layout, standard [i, f, g, o] order
    w_ih = jax.random.uniform(keys[0], (input_size, 4 * hidden_size),
                              jnp.float32, -k, k)
    w_hh = jax.random.uniform(keys[1], (hidden_size, 4 * hidden_size),
                              jnp.float32, -k, k)
    b_ih = jax.random.uniform(keys[2], (4 * hidden_size,), jnp.float32, -k, k)
    b_hh = jax.random.uniform(keys[3], (4 * hidden_size,), jnp.float32, -k, k)
    bias = (b_ih + b_hh).reshape(1, 4 * hidden_size)
    w_fc = jax.random.uniform(keys[4], (hidden_size, output_size),
                              jnp.float32, -k, k)
    b_fc = jax.random.uniform(keys[5], (1, output_size), jnp.float32, -k, k)
    return (w_ih, w_hh, bias, w_fc, b_fc)


def lstm_reference(x, params):
    """Pure-JAX f32 reference (lax.scan) matching PyTorch nn.LSTM semantics."""
    w_ih, w_hh, bias, w_fc, b_fc = params
    B = x.shape[0]
    H = w_hh.shape[0]

    def step(carry, x_t):
        h, c = carry
        z = x_t @ w_ih + h @ w_hh + bias
        i = jax.nn.sigmoid(z[:, 0 * H:1 * H])
        f = jax.nn.sigmoid(z[:, 1 * H:2 * H])
        g = jnp.tanh(z[:, 2 * H:3 * H])
        o = jax.nn.sigmoid(z[:, 3 * H:4 * H])
        c = f * c + i * g
        h = o * jnp.tanh(c)
        return (h, c), h

    h0 = jnp.zeros((B, H), jnp.float32)
    c0 = jnp.zeros((B, H), jnp.float32)
    (h_last, _), _ = jax.lax.scan(step, (h0, c0), jnp.transpose(x, (1, 0, 2)))
    return h_last @ w_fc + b_fc


if __name__ == "__main__":
    key = jax.random.PRNGKey(0)
    k_x, k_p = jax.random.split(key)

    batch, seq = 2, 8
    x = jax.random.normal(k_x, (batch, seq, INPUT_SIZE), jnp.float32)
    params = init_params(k_p, INPUT_SIZE, HIDDEN_SIZE, OUTPUT_SIZE)

    out = lstm_forward(x, params)
    out = jax.block_until_ready(out)

    ref = lstm_reference(x, params)
    assert out.shape == (batch, OUTPUT_SIZE)
    # bf16 matmul operands with f32 accumulation -> loosened tolerance vs f32 ref
    assert jnp.allclose(out, ref, atol=2e-2, rtol=2e-2), (out, ref)

    print("KERNEL_OK")
</pallas_src>

<mosaic_0001>
module attributes {stable_mosaic.version = 11 : i64} {
  func.func @_lstm_kernel(%arg0: i32, %arg1: memref<8x8x46xf32, #tpu.memory_space<vmem>>, %arg2: memref<46x256xbf16, #tpu.memory_space<vmem>>, %arg3: memref<64x256xbf16, #tpu.memory_space<vmem>>, %arg4: memref<1x256xf32, #tpu.memory_space<vmem>>, %arg5: memref<64x1xf32, #tpu.memory_space<vmem>>, %arg6: memref<1x1xf32, #tpu.memory_space<vmem>>, %arg7: memref<8x1xf32, #tpu.memory_space<vmem>>, %arg8: memref<8x8x256xf32, #tpu.memory_space<vmem>>) attributes {dimension_semantics = [#tpu.dimension_semantics<arbitrary>], iteration_bounds = array<i64: 1>, scalar_prefetch = 0 : i64, scratch_operands = 1 : i64, tpu.core_type = #tpu.core_type<tc>, window_params = [{pipeline_mode = #tpu.pipeline_mode<synchronous>, transform_indices = @transform_0, window_bounds = array<i64: 8, 8, 46>}, {pipeline_mode = #tpu.pipeline_mode<synchronous>, transform_indices = @transform_1, window_bounds = array<i64: 46, 256>}, {pipeline_mode = #tpu.pipeline_mode<synchronous>, transform_indices = @transform_2, window_bounds = array<i64: 64, 256>}, {pipeline_mode = #tpu.pipeline_mode<synchronous>, transform_indices = @transform_3, window_bounds = array<i64: 1, 256>}, {pipeline_mode = #tpu.pipeline_mode<synchronous>, transform_indices = @transform_4, window_bounds = array<i64: 64, 1>}, {pipeline_mode = #tpu.pipeline_mode<synchronous>, transform_indices = @transform_5, window_bounds = array<i64: 1, 1>}, {pipeline_mode = #tpu.pipeline_mode<synchronous>, transform_indices = @transform_6, window_bounds = array<i64: 8, 1>}]} {
    %c0 = arith.constant 0 : index
    %c0_0 = arith.constant 0 : index
    %c0_1 = arith.constant 0 : index
    %0 = vector.load %arg1[%c0, %c0_0, %c0_1] : memref<8x8x46xf32, #tpu.memory_space<vmem>>, vector<8x8x46xf32>
    %1 = vector.shape_cast %0 : vector<8x8x46xf32> to vector<64x46xf32>
    %2 = arith.truncf %1 : vector<64x46xf32> to vector<64x46xbf16>
    %c0_2 = arith.constant 0 : index
    %c0_3 = arith.constant 0 : index
    %3 = vector.load %arg2[%c0_2, %c0_3] : memref<46x256xbf16, #tpu.memory_space<vmem>>, vector<46x256xbf16>
    %cst = arith.constant dense<0.000000e+00> : vector<64x256xf32>
    %4 = tpu.matmul %2, %3, %cst {dimension_numbers = #tpu.dot_dimension_numbers<[1], [0], [0], [1], [0, 0, 1, 1], [], []>} : vector<64x46xbf16>, vector<46x256xbf16>, vector<64x256xf32> -> vector<64x256xf32>
    %c0_4 = arith.constant 0 : index
    %c0_5 = arith.constant 0 : index
    %5 = vector.load %arg4[%c0_4, %c0_5] : memref<1x256xf32, #tpu.memory_space<vmem>>, vector<1x256xf32>
    %6 = vector.broadcast %5 : vector<1x256xf32> to vector<64x256xf32>
    %7 = arith.addf %4, %6 : vector<64x256xf32>
    %8 = vector.shape_cast %7 : vector<64x256xf32> to vector<8x8x256xf32>
    %c0_6 = arith.constant 0 : index
    %c0_7 = arith.constant 0 : index
    %c0_8 = arith.constant 0 : index
    %9 = vector.load %arg8[%c0_6, %c0_7, %c0_8] : memref<8x8x256xf32, #tpu.memory_space<vmem>>, vector<8x8x256xf32>
    tpu.vector_store %arg8[%c0_6, %c0_7, %c0_8], %8 {strides = array<i32>} : memref<8x8x256xf32, #tpu.memory_space<vmem>>, vector<8x8x256xf32>,
    %c0_9 = arith.constant 0 : index
    %c0_10 = arith.constant 0 : index
    %10 = vector.load %arg3[%c0_9, %c0_10] : memref<64x256xbf16, #tpu.memory_space<vmem>>, vector<64x256xbf16>
    %cst_11 = arith.constant 0.000000e+00 : f32
    %11 = vector.broadcast %cst_11 : f32 to vector<8x64xf32>
    %cst_12 = arith.constant 0.000000e+00 : f32
    %12 = vector.broadcast %cst_12 : f32 to vector<8x64xf32>
    %c0_i32 = arith.constant 0 : i32
    %13 = arith.index_cast %c0_i32 : i32 to index
    %c0_13 = arith.constant 0 : index
    %c0_14 = arith.constant 0 : index
    %14 = vector.load %arg8[%13, %c0_13, %c0_14] : memref<8x8x256xf32, #tpu.memory_space<vmem>>, vector<1x8x256xf32>
    %15 = vector.shape_cast %14 : vector<1x8x256xf32> to vector<8x256xf32>
    %16 = arith.truncf %11 : vector<8x64xf32> to vector<8x64xbf16>
    %cst_15 = arith.constant dense<0.000000e+00> : vector<8x256xf32>
    %17 = tpu.matmul %16, %10, %cst_15 {dimension_numbers = #tpu.dot_dimension_numbers<[1], [0], [0], [1], [0, 0, 1, 1], [], []>} : vector<8x64xbf16>, vector<64x256xbf16>, vector<8x256xf32> -> vector<8x256xf32>
    %18 = arith.addf %15, %17 : vector<8x256xf32>
    %19 = vector.extract_strided_slice %18 {offsets = [0, 0], sizes = [8, 192], strides = [1, 1]} : vector<8x256xf32> to vector<8x192xf32>
    %20 = arith.negf %19 : vector<8x192xf32>
    %21 = math.exp %20 : vector<8x192xf32>
    %cst_16 = arith.constant 1.000000e+00 : f32
    %22 = vector.broadcast %cst_16 : f32 to vector<8x192xf32>
    %23 = arith.addf %22, %21 : vector<8x192xf32>
    %24 = arith.divf %22, %23 : vector<8x192xf32>
    %25 = vector.extract_strided_slice %24 {offsets = [0, 0], sizes = [8, 64], strides = [1, 1]} : vector<8x192xf32> to vector<8x64xf32>
    %26 = vector.extract_strided_slice %24 {offsets = [0, 64], sizes = [8, 64], strides = [1, 1]} : vector<8x192xf32> to vector<8x64xf32>
    %27 = vector.extract_strided_slice %24 {offsets = [0, 128], sizes = [8, 64], strides = [1, 1]} : vector<8x192xf32> to vector<8x64xf32>
    %28 = vector.extract_strided_slice %18 {offsets = [0, 192], sizes = [8, 64], strides = [1, 1]} : vector<8x256xf32> to vector<8x64xf32>
    %29 = math.tanh %28 : vector<8x64xf32>
    %30 = arith.mulf %26, %12 : vector<8x64xf32>
    %31 = arith.mulf %25, %29 : vector<8x64xf32>
    %32 = arith.addf %30, %31 : vector<8x64xf32>
    %33 = math.tanh %32 : vector<8x64xf32>
    %34 = arith.mulf %27, %33 : vector<8x64xf32>
    %c1_i32 = arith.constant 1 : i32
    %35 = arith.index_cast %c1_i32 : i32 to index
    %c0_17 = arith.constant 0 : index
    %c0_18 = arith.constant 0 : index
    %36 = vector.load %arg8[%35, %c0_17, %c0_18] : memref<8x8x256xf32, #tpu.memory_space<vmem>>, vector<1x8x256xf32>
    %37 = vector.shape_cast %36 : vector<1x8x256xf32> to vector<8x256xf32>
    %38 = arith.truncf %34 : vector<8x64xf32> to vector<8x64xbf16>
    %cst_19 = arith.constant dense<0.000000e+00> : vector<8x256xf32>
    %39 = tpu.matmul %38, %10, %cst_19 {dimension_numbers = #tpu.dot_dimension_numbers<[1], [0], [0], [1], [0, 0, 1, 1], [], []>} : vector<8x64xbf16>, vector<64x256xbf16>, vector<8x256xf32> -> vector<8x256xf32>
    %40 = arith.addf %37, %39 : vector<8x256xf32>
    %41 = vector.extract_strided_slice %40 {offsets = [0, 0], sizes = [8, 192], strides = [1, 1]} : vector<8x256xf32> to vector<8x192xf32>
    %42 = arith.negf %41 : vector<8x192xf32>
    %43 = math.exp %42 : vector<8x192xf32>
    %cst_20 = arith.constant 1.000000e+00 : f32
    %44 = vector.broadcast %cst_20 : f32 to vector<8x192xf32>
    %45 = arith.addf %44, %43 : vector<8x192xf32>
    %46 = arith.divf %44, %45 : vector<8x192xf32>
    %47 = vector.extract_strided_slice %46 {offsets = [0, 0], sizes = [8, 64], strides = [1, 1]} : vector<8x192xf32> to vector<8x64xf32>
    %48 = vector.extract_strided_slice %46 {offsets = [0, 64], sizes = [8, 64], strides = [1, 1]} : vector<8x192xf32> to vector<8x64xf32>
    %49 = vector.extract_strided_slice %46 {offsets = [0, 128], sizes = [8, 64], strides = [1, 1]} : vector<8x192xf32> to vector<8x64xf32>
    %50 = vector.extract_strided_slice %40 {offsets = [0, 192], sizes = [8, 64], strides = [1, 1]} : vector<8x256xf32> to vector<8x64xf32>
    %51 = math.tanh %50 : vector<8x64xf32>
    %52 = arith.mulf %48, %32 : vector<8x64xf32>
    %53 = arith.mulf %47, %51 : vector<8x64xf32>
    %54 = arith.addf %52, %53 : vector<8x64xf32>
    %55 = math.tanh %54 : vector<8x64xf32>
    %56 = arith.mulf %49, %55 : vector<8x64xf32>
    %c2_i32 = arith.constant 2 : i32
    %57 = arith.index_cast %c2_i32 : i32 to index
    %c0_21 = arith.constant 0 : index
    %c0_22 = arith.constant 0 : index
    %58 = vector.load %arg8[%57, %c0_21, %c0_22] : memref<8x8x256xf32, #tpu.memory_space<vmem>>, vector<1x8x256xf32>
    %59 = vector.shape_cast %58 : vector<1x8x256xf32> to vector<8x256xf32>
    %60 = arith.truncf %56 : vector<8x64xf32> to vector<8x64xbf16>
    %cst_23 = arith.constant dense<0.000000e+00> : vector<8x256xf32>
    %61 = tpu.matmul %60, %10, %cst_23 {dimension_numbers = #tpu.dot_dimension_numbers<[1], [0], [0], [1], [0, 0, 1, 1], [], []>} : vector<8x64xbf16>, vector<64x256xbf16>, vector<8x256xf32> -> vector<8x256xf32>
    %62 = arith.addf %59, %61 : vector<8x256xf32>
    %63 = vector.extract_strided_slice %62 {offsets = [0, 0], sizes = [8, 192], strides = [1, 1]} : vector<8x256xf32> to vector<8x192xf32>
    %64 = arith.negf %63 : vector<8x192xf32>
    %65 = math.exp %64 : vector<8x192xf32>
    %cst_24 = arith.constant 1.000000e+00 : f32
    %66 = vector.broadcast %cst_24 : f32 to vector<8x192xf32>
    %67 = arith.addf %66, %65 : vector<8x192xf32>
    %68 = arith.divf %66, %67 : vector<8x192xf32>
    %69 = vector.extract_strided_slice %68 {offsets = [0, 0], sizes = [8, 64], strides = [1, 1]} : vector<8x192xf32> to vector<8x64xf32>
    %70 = vector.extract_strided_slice %68 {offsets = [0, 64], sizes = [8, 64], strides = [1, 1]} : vector<8x192xf32> to vector<8x64xf32>
    %71 = vector.extract_strided_slice %68 {offsets = [0, 128], sizes = [8, 64], strides = [1, 1]} : vector<8x192xf32> to vector<8x64xf32>
    %72 = vector.extract_strided_slice %62 {offsets = [0, 192], sizes = [8, 64], strides = [1, 1]} : vector<8x256xf32> to vector<8x64xf32>
    %73 = math.tanh %72 : vector<8x64xf32>
    %74 = arith.mulf %70, %54 : vector<8x64xf32>
    %75 = arith.mulf %69, %73 : vector<8x64xf32>
    %76 = arith.addf %74, %75 : vector<8x64xf32>
    %77 = math.tanh %76 : vector<8x64xf32>
    %78 = arith.mulf %71, %77 : vector<8x64xf32>
    %c3_i32 = arith.constant 3 : i32
    %79 = arith.index_cast %c3_i32 : i32 to index
    %c0_25 = arith.constant 0 : index
    %c0_26 = arith.constant 0 : index
    %80 = vector.load %arg8[%79, %c0_25, %c0_26] : memref<8x8x256xf32, #tpu.memory_space<vmem>>, vector<1x8x256xf32>
    %81 = vector.shape_cast %80 : vector<1x8x256xf32> to vector<8x256xf32>
    %82 = arith.truncf %78 : vector<8x64xf32> to vector<8x64xbf16>
    %cst_27 = arith.constant dense<0.000000e+00> : vector<8x256xf32>
    %83 = tpu.matmul %82, %10, %cst_27 {dimension_numbers = #tpu.dot_dimension_numbers<[1], [0], [0], [1], [0, 0, 1, 1], [], []>} : vector<8x64xbf16>, vector<64x256xbf16>, vector<8x256xf32> -> vector<8x256xf32>
    %84 = arith.addf %81, %83 : vector<8x256xf32>
    %85 = vector.extract_strided_slice %84 {offsets = [0, 0], sizes = [8, 192], strides = [1, 1]} : vector<8x256xf32> to vector<8x192xf32>
    %86 = arith.negf %85 : vector<8x192xf32>
    %87 = math.exp %86 : vector<8x192xf32>
    %cst_28 = arith.constant 1.000000e+00 : f32
    %88 = vector.broadcast %cst_28 : f32 to vector<8x192xf32>
    %89 = arith.addf %88, %87 : vector<8x192xf32>
    %90 = arith.divf %88, %89 : vector<8x192xf32>
    %91 = vector.extract_strided_slice %90 {offsets = [0, 0], sizes = [8, 64], strides = [1, 1]} : vector<8x192xf32> to vector<8x64xf32>
    %92 = vector.extract_strided_slice %90 {offsets = [0, 64], sizes = [8, 64], strides = [1, 1]} : vector<8x192xf32> to vector<8x64xf32>
    %93 = vector.extract_strided_slice %90 {offsets = [0, 128], sizes = [8, 64], strides = [1, 1]} : vector<8x192xf32> to vector<8x64xf32>
    %94 = vector.extract_strided_slice %84 {offsets = [0, 192], sizes = [8, 64], strides = [1, 1]} : vector<8x256xf32> to vector<8x64xf32>
    %95 = math.tanh %94 : vector<8x64xf32>
    %96 = arith.mulf %92, %76 : vector<8x64xf32>
    %97 = arith.mulf %91, %95 : vector<8x64xf32>
    %98 = arith.addf %96, %97 : vector<8x64xf32>
    %99 = math.tanh %98 : vector<8x64xf32>
    %100 = arith.mulf %93, %99 : vector<8x64xf32>
    %c4_i32 = arith.constant 4 : i32
    %101 = arith.index_cast %c4_i32 : i32 to index
    %c0_29 = arith.constant 0 : index
    %c0_30 = arith.constant 0 : index
    %102 = vector.load %arg8[%101, %c0_29, %c0_30] : memref<8x8x256xf32, #tpu.memory_space<vmem>>, vector<1x8x256xf32>
    %103 = vector.shape_cast %102 : vector<1x8x256xf32> to vector<8x256xf32>
    %104 = arith.truncf %100 : vector<8x64xf32> to vector<8x64xbf16>
    %cst_31 = arith.constant dense<0.000000e+00> : vector<8x256xf32>
    %105 = tpu.matmul %104, %10, %cst_31 {dimension_numbers = #tpu.dot_dimension_numbers<[1], [0], [0], [1], [0, 0, 1, 1], [], []>} : vector<8x64xbf16>, vector<64x256xbf16>, vector<8x256xf32> -> vector<8x256xf32>
    %106 = arith.addf %103, %105 : vector<8x256xf32>
    %107 = vector.extract_strided_slice %106 {offsets = [0, 0], sizes = [8, 192], strides = [1, 1]} : vector<8x256xf32> to vector<8x192xf32>
    %108 = arith.negf %107 : vector<8x192xf32>
    %109 = math.exp %108 : vector<8x192xf32>
    %cst_32 = arith.constant 1.000000e+00 : f32
    %110 = vector.broadcast %cst_32 : f32 to vector<8x192xf32>
    %111 = arith.addf %110, %109 : vector<8x192xf32>
    %112 = arith.divf %110, %111 : vector<8x192xf32>
    %113 = vector.extract_strided_slice %112 {offsets = [0, 0], sizes = [8, 64], strides = [1, 1]} : vector<8x192xf32> to vector<8x64xf32>
    %114 = vector.extract_strided_slice %112 {offsets = [0, 64], sizes = [8, 64], strides = [1, 1]} : vector<8x192xf32> to vector<8x64xf32>
    %115 = vector.extract_strided_slice %112 {offsets = [0, 128], sizes = [8, 64], strides = [1, 1]} : vector<8x192xf32> to vector<8x64xf32>
    %116 = vector.extract_strided_slice %106 {offsets = [0, 192], sizes = [8, 64], strides = [1, 1]} : vector<8x256xf32> to vector<8x64xf32>
    %117 = math.tanh %116 : vector<8x64xf32>
    %118 = arith.mulf %114, %98 : vector<8x64xf32>
    %119 = arith.mulf %113, %117 : vector<8x64xf32>
    %120 = arith.addf %118, %119 : vector<8x64xf32>
    %121 = math.tanh %120 : vector<8x64xf32>
    %122 = arith.mulf %115, %121 : vector<8x64xf32>
    %c5_i32 = arith.constant 5 : i32
    %123 = arith.index_cast %c5_i32 : i32 to index
    %c0_33 = arith.constant 0 : index
    %c0_34 = arith.constant 0 : index
    %124 = vector.load %arg8[%123, %c0_33, %c0_34] : memref<8x8x256xf32, #tpu.memory_space<vmem>>, vector<1x8x256xf32>
    %125 = vector.shape_cast %124 : vector<1x8x256xf32> to vector<8x256xf32>
    %126 = arith.truncf %122 : vector<8x64xf32> to vector<8x64xbf16>
    %cst_35 = arith.constant dense<0.000000e+00> : vector<8x256xf32>
    %127 = tpu.matmul %126, %10, %cst_35 {dimension_numbers = #tpu.dot_dimension_numbers<[1], [0], [0], [1], [0, 0, 1, 1], [], []>} : vector<8x64xbf16>, vector<64x256xbf16>, vector<8x256xf32> -> vector<8x256xf32>
    %128 = arith.addf %125, %127 : vector<8x256xf32>
    %129 = vector.extract_strided_slice %128 {offsets = [0, 0], sizes = [8, 192], strides = [1, 1]} : vector<8x256xf32> to vector<8x192xf32>
    %130 = arith.negf %129 : vector<8x192xf32>
    %131 = math.exp %130 : vector<8x192xf32>
    %cst_36 = arith.constant 1.000000e+00 : f32
    %132 = vector.broadcast %cst_36 : f32 to vector<8x192xf32>
    %133 = arith.addf %132, %131 : vector<8x192xf32>
    %134 = arith.divf %132, %133 : vector<8x192xf32>
    %135 = vector.extract_strided_slice %134 {offsets = [0, 0], sizes = [8, 64], strides = [1, 1]} : vector<8x192xf32> to vector<8x64xf32>
    %136 = vector.extract_strided_slice %134 {offsets = [0, 64], sizes = [8, 64], strides = [1, 1]} : vector<8x192xf32> to vector<8x64xf32>
    %137 = vector.extract_strided_slice %134 {offsets = [0, 128], sizes = [8, 64], strides = [1, 1]} : vector<8x192xf32> to vector<8x64xf32>
    %138 = vector.extract_strided_slice %128 {offsets = [0, 192], sizes = [8, 64], strides = [1, 1]} : vector<8x256xf32> to vector<8x64xf32>
    %139 = math.tanh %138 : vector<8x64xf32>
    %140 = arith.mulf %136, %120 : vector<8x64xf32>
    %141 = arith.mulf %135, %139 : vector<8x64xf32>
    %142 = arith.addf %140, %141 : vector<8x64xf32>
    %143 = math.tanh %142 : vector<8x64xf32>
    %144 = arith.mulf %137, %143 : vector<8x64xf32>
    %c6_i32 = arith.constant 6 : i32
    %145 = arith.index_cast %c6_i32 : i32 to index
    %c0_37 = arith.constant 0 : index
    %c0_38 = arith.constant 0 : index
    %146 = vector.load %arg8[%145, %c0_37, %c0_38] : memref<8x8x256xf32, #tpu.memory_space<vmem>>, vector<1x8x256xf32>
    %147 = vector.shape_cast %146 : vector<1x8x256xf32> to vector<8x256xf32>
    %148 = arith.truncf %144 : vector<8x64xf32> to vector<8x64xbf16>
    %cst_39 = arith.constant dense<0.000000e+00> : vector<8x256xf32>
    %149 = tpu.matmul %148, %10, %cst_39 {dimension_numbers = #tpu.dot_dimension_numbers<[1], [0], [0], [1], [0, 0, 1, 1], [], []>} : vector<8x64xbf16>, vector<64x256xbf16>, vector<8x256xf32> -> vector<8x256xf32>
    %150 = arith.addf %147, %149 : vector<8x256xf32>
    %151 = vector.extract_strided_slice %150 {offsets = [0, 0], sizes = [8, 192], strides = [1, 1]} : vector<8x256xf32> to vector<8x192xf32>
    %152 = arith.negf %151 : vector<8x192xf32>
    %153 = math.exp %152 : vector<8x192xf32>
    %cst_40 = arith.constant 1.000000e+00 : f32
    %154 = vector.broadcast %cst_40 : f32 to vector<8x192xf32>
    %155 = arith.addf %154, %153 : vector<8x192xf32>
    %156 = arith.divf %154, %155 : vector<8x192xf32>
    %157 = vector.extract_strided_slice %156 {offsets = [0, 0], sizes = [8, 64], strides = [1, 1]} : vector<8x192xf32> to vector<8x64xf32>
    %158 = vector.extract_strided_slice %156 {offsets = [0, 64], sizes = [8, 64], strides = [1, 1]} : vector<8x192xf32> to vector<8x64xf32>
    %159 = vector.extract_strided_slice %156 {offsets = [0, 128], sizes = [8, 64], strides = [1, 1]} : vector<8x192xf32> to vector<8x64xf32>
    %160 = vector.extract_strided_slice %150 {offsets = [0, 192], sizes = [8, 64], strides = [1, 1]} : vector<8x256xf32> to vector<8x64xf32>
    %161 = math.tanh %160 : vector<8x64xf32>
    %162 = arith.mulf %158, %142 : vector<8x64xf32>
    %163 = arith.mulf %157, %161 : vector<8x64xf32>
    %164 = arith.addf %162, %163 : vector<8x64xf32>
    %165 = math.tanh %164 : vector<8x64xf32>
    %166 = arith.mulf %159, %165 : vector<8x64xf32>
    %c7_i32 = arith.constant 7 : i32
    %167 = arith.index_cast %c7_i32 : i32 to index
    %c0_41 = arith.constant 0 : index
    %c0_42 = arith.constant 0 : index
    %168 = vector.load %arg8[%167, %c0_41, %c0_42] : memref<8x8x256xf32, #tpu.memory_space<vmem>>, vector<1x8x256xf32>
    %169 = vector.shape_cast %168 : vector<1x8x256xf32> to vector<8x256xf32>
    %170 = arith.truncf %166 : vector<8x64xf32> to vector<8x64xbf16>
    %cst_43 = arith.constant dense<0.000000e+00> : vector<8x256xf32>
    %171 = tpu.matmul %170, %10, %cst_43 {dimension_numbers = #tpu.dot_dimension_numbers<[1], [0], [0], [1], [0, 0, 1, 1], [], []>} : vector<8x64xbf16>, vector<64x256xbf16>, vector<8x256xf32> -> vector<8x256xf32>
    %172 = arith.addf %169, %171 : vector<8x256xf32>
    %173 = vector.extract_strided_slice %172 {offsets = [0, 0], sizes = [8, 192], strides = [1, 1]} : vector<8x256xf32> to vector<8x192xf32>
    %174 = arith.negf %173 : vector<8x192xf32>
    %175 = math.exp %174 : vector<8x192xf32>
    %cst_44 = arith.constant 1.000000e+00 : f32
    %176 = vector.broadcast %cst_44 : f32 to vector<8x192xf32>
    %177 = arith.addf %176, %175 : vector<8x192xf32>
    %178 = arith.divf %176, %177 : vector<8x192xf32>
    %179 = vector.extract_strided_slice %178 {offsets = [0, 0], sizes = [8, 64], strides = [1, 1]} : vector<8x192xf32> to vector<8x64xf32>
    %180 = vector.extract_strided_slice %178 {offsets = [0, 64], sizes = [8, 64], strides = [1, 1]} : vector<8x192xf32> to vector<8x64xf32>
    %181 = vector.extract_strided_slice %178 {offsets = [0, 128], sizes = [8, 64], strides = [1, 1]} : vector<8x192xf32> to vector<8x64xf32>
    %182 = vector.extract_strided_slice %172 {offsets = [0, 192], sizes = [8, 64], strides = [1, 1]} : vector<8x256xf32> to vector<8x64xf32>
    %183 = math.tanh %182 : vector<8x64xf32>
    %184 = arith.mulf %180, %164 : vector<8x64xf32>
    %185 = arith.mulf %179, %183 : vector<8x64xf32>
    %186 = arith.addf %184, %185 : vector<8x64xf32>
    %187 = math.tanh %186 : vector<8x64xf32>
    %188 = arith.mulf %181, %187 : vector<8x64xf32>
    %c8_i32 = arith.constant 8 : i32
    %c0_45 = arith.constant 0 : index
    %c0_46 = arith.constant 0 : index
    %189 = vector.load %arg5[%c0_45, %c0_46] : memref<64x1xf32, #tpu.memory_space<vmem>>, vector<64x1xf32>
    %cst_47 = arith.constant dense<0.000000e+00> : vector<8x1xf32>
    %190 = tpu.matmul %188, %189, %cst_47 {dimension_numbers = #tpu.dot_dimension_numbers<[1], [0], [0], [1], [0, 0, 1, 1], [], []>} : vector<8x64xf32>, vector<64x1xf32>, vector<8x1xf32> -> vector<8x1xf32>
    %c0_48 = arith.constant 0 : index
    %c0_49 = arith.constant 0 : index
    %191 = vector.load %arg6[%c0_48, %c0_49] : memref<1x1xf32, #tpu.memory_space<vmem>>, vector<1x1xf32>
    %192 = vector.broadcast %191 : vector<1x1xf32> to vector<8x1xf32>
    %193 = arith.addf %190, %192 : vector<8x1xf32>
    %c0_50 = arith.constant 0 : index
    %c0_51 = arith.constant 0 : index
    %194 = vector.load %arg7[%c0_50, %c0_51] : memref<8x1xf32, #tpu.memory_space<vmem>>, vector<8x1xf32>
    tpu.vector_store %arg7[%c0_50, %c0_51], %193 {strides = array<i32>} : memref<8x1xf32, #tpu.memory_space<vmem>>, vector<8x1xf32>,
    return
  }
  func.func @transform_0(%arg0: i32) -> (i32, i32, i32) {
    %c0_i32 = arith.constant 0 : i32
    %c0_i32_0 = arith.constant 0 : i32
    %c0_i32_1 = arith.constant 0 : i32
    %c0_i32_2 = arith.constant 0 : i32
    return %c0_i32, %c0_i32_0, %c0_i32_1 : i32, i32, i32
  }
  func.func @transform_1(%arg0: i32) -> (i32, i32) {
    %c0_i32 = arith.constant 0 : i32
    %c0_i32_0 = arith.constant 0 : i32
    %c0_i32_1 = arith.constant 0 : i32
    return %c0_i32, %c0_i32_0 : i32, i32
  }
  func.func @transform_2(%arg0: i32) -> (i32, i32) {
    %c0_i32 = arith.constant 0 : i32
    %c0_i32_0 = arith.constant 0 : i32
    %c0_i32_1 = arith.constant 0 : i32
    return %c0_i32, %c0_i32_0 : i32, i32
  }
  func.func @transform_3(%arg0: i32) -> (i32, i32) {
    %c0_i32 = arith.constant 0 : i32
    %c0_i32_0 = arith.constant 0 : i32
    %c0_i32_1 = arith.constant 0 : i32
    return %c0_i32, %c0_i32_0 : i32, i32
  }
  func.func @transform_4(%arg0: i32) -> (i32, i32) {
    %c0_i32 = arith.constant 0 : i32
    %c0_i32_0 = arith.constant 0 : i32
    %c0_i32_1 = arith.constant 0 : i32
    return %c0_i32, %c0_i32_0 : i32, i32
  }
  func.func @transform_5(%arg0: i32) -> (i32, i32) {
    %c0_i32 = arith.constant 0 : i32
    %c0_i32_0 = arith.constant 0 : i32
    %c0_i32_1 = arith.constant 0 : i32
    return %c0_i32, %c0_i32_0 : i32, i32
  }
  func.func @transform_6(%arg0: i32) -> (i32, i32) {
    %c0_i32 = arith.constant 0 : i32
    %c0_i32_0 = arith.constant 0 : i32
    %c0_i32_1 = arith.constant 0 : i32
    return %c0_i32, %c0_i32_0 : i32, i32
  }
}

</mosaic_0001>

<llo_original>
// kernel: tpu_custom_call.1
$region0: #{tpu_custom_call.1}
  #allocation0 [shape = 'u32[]', space=smem, size = 0x4, offset = 0x4, fixed_abs, tag = 'smem constant byte address 0x4 - core index']
  #allocation1 [shape = 'u32[144,128]{1,0:T(1,128)}', space=vmem, size = 0x12000, scoped, tag = 'internal scratch']
  #allocation2 [shape = 'f32[8,8,256]{2,1,0:T(8,128)}', space=vmem, size = 0x10000, scoped, tag = 'scratch operand']
  #allocation3 [shape = 'f32[1,1]{1,0:T(1,128)S(1)}', space=vmem, size = 0x200, scoped, tag = 'scoped memory for tpu_custom_call.1']
  %s0 = inlined_call_operand.vmem [shape: f32[8,8,46], index: 0, kind: input, shape index: {}]
  %s1 = inlined_call_operand.hbm [shape: bf16[46,256], index: 1, kind: input, shape index: {}]
  %s2 = inlined_call_operand.hbm [shape: bf16[64,256], index: 2, kind: input, shape index: {}]
  %s3 = inlined_call_operand.vmem [shape: f32[1,256], index: 3, kind: input, shape index: {}]
  %s4 = inlined_call_operand.vmem [shape: f32[64,1], index: 4, kind: input, shape index: {}]
  %s5 = inlined_call_operand.<no memory space> [shape: f32[1,1], index: 5, kind: input, shape index: {}]
  %s6 = inlined_call_operand.vmem [shape: f32[8,1], index: 6, kind: output, shape index: {}]
  %s7 = sld [smem:[#allocation0]]
  $region42: #{tpu_custom_call.1} parent=0
    _
  %s9 = ssub.s32 1, %s7
  %s10 = scalar_select 0, %s9, %s7
  %v11 = vstv %s5
  %12 = vst [vmem:[#allocation3] sm:$0x1] %v11
  $region1: #{tpu_custom_call.1} parent=0
    #allocation4 [shape = 'u8[24576]{0}', space=vmem, size = 0x6000, scoped, tag = 'input window, operand 1, single buffered']
    #allocation5 [shape = 's32[1]{0}', space=sflag, size = 0x4, scoped, tag = 'scoped memory for tpu_custom_call.1']
    #allocation6 [shape = 'u8[32768]{0}', space=vmem, size = 0x8000, scoped, tag = 'input window, operand 2, single buffered']
    #allocation7 [shape = 's32[1]{0}', space=sflag, size = 0x4, scoped, tag = 'scoped memory for tpu_custom_call.1']
    %13 = vsyncpa [#allocation5], 0
    %14 = vsyncpa [#allocation7], 0
    // Predicated region
    $region2: #{tpu_custom_call.1} parent=1 // pred_check
      _
    $region3: #{tpu_custom_call.1} parent=1 // pred_check_branch
      %16 = sbr.rel (0) target = $region5
    $region4: #{tpu_custom_call.1} parent=1 // pred_region
      _
    $region5: #{tpu_custom_call.1} parent=1 // pred_fallthru
      _
    // Predicated region
    $region6: #{tpu_custom_call.1} parent=1 // pred_check
      _
    $region7: #{tpu_custom_call.1} parent=1 // pred_check_branch
      %18 = sbr.rel (0) target = $region9
    $region8: #{tpu_custom_call.1} parent=1 // pred_region
      %s20 = ssub.s32 768, 768
      %21 = vsyncadd [#allocation5], %s20
      %s22 = sshll.u32 [#allocation4], 4
      %s23 = int_to_ptr.vmem [resolvable:$true] %s22
      %28 = dma.hbm_to_vmem [thread:$0]  %s1, 768, %s23, [#allocation5], 128, 128, 8
    $region9: #{tpu_custom_call.1} parent=1 // pred_fallthru
      _
    // Predicated region
    $region10: #{tpu_custom_call.1} parent=1 // pred_check
      _
    $region11: #{tpu_custom_call.1} parent=1 // pred_check_branch
      %30 = sbr.rel (0) target = $region13
    $region12: #{tpu_custom_call.1} parent=1 // pred_region
      %s32 = ssub.s32 1024, 1024
      %33 = vsyncadd [#allocation7], %s32
      %s34 = sshll.u32 [#allocation6], 4
      %s35 = int_to_ptr.vmem [resolvable:$true] %s34
      %40 = dma.hbm_to_vmem [thread:$0]  %s2, 1024, %s35, [#allocation7], 128, 128, 8
    $region13: #{tpu_custom_call.1} parent=1 // pred_fallthru
      _
    // Predicated region
    $region14: #{tpu_custom_call.1} parent=1 // pred_check
      _
    $region15: #{tpu_custom_call.1} parent=1 // pred_check_branch
      %42 = sbr.rel (0) target = $region17
    $region16: #{tpu_custom_call.1} parent=1 // pred_region
      _
    $region17: #{tpu_custom_call.1} parent=1 // pred_fallthru
      _
    // Predicated region
    $region18: #{tpu_custom_call.1} parent=1 // pred_check
      _
    $region19: #{tpu_custom_call.1} parent=1 // pred_check_branch
      %44 = sbr.rel (0) target = $region21
    $region20: #{tpu_custom_call.1} parent=1 // pred_region
      _
    $region21: #{tpu_custom_call.1} parent=1 // pred_fallthru
      _
    // Predicated region
    $region22: #{tpu_custom_call.1} parent=1 // pred_check
      _
    $region23: #{tpu_custom_call.1} parent=1 // pred_check_branch
      %46 = sbr.rel (0) target = $region25
    $region24: #{tpu_custom_call.1} parent=1 // pred_region
      _
    $region25: #{tpu_custom_call.1} parent=1 // pred_fallthru
      _
    // Predicated region
    $region26: #{tpu_custom_call.1} parent=1 // pred_check
      _
    $region27: #{tpu_custom_call.1} parent=1 // pred_check_branch
      %48 = sbr.rel (0) target = $region29
    $region28: #{tpu_custom_call.1} parent=1 // pred_region
      %49 = dma.done [#allocation5], 768
    $region29: #{tpu_custom_call.1} parent=1 // pred_fallthru
      _
    // Predicated region
    $region30: #{tpu_custom_call.1} parent=1 // pred_check
      _
    $region31: #{tpu_custom_call.1} parent=1 // pred_check_branch
      %51 = sbr.rel (0) target = $region33
    $region32: #{tpu_custom_call.1} parent=1 // pred_region
      %52 = dma.done [#allocation7], 1024
    $region33: #{tpu_custom_call.1} parent=1 // pred_fallthru
      _
    %v54 = vld [vmem:[%s0] sm:$0xff]
    %v55 = vld [vmem:[%s0 + $0x8] sm:$0xff]
    %v56 = vld [vmem:[%s0 + $0x10] sm:$0xff]
    %v57 = vld [vmem:[%s0 + $0x18] sm:$0xff]
    %v58 = vld [vmem:[%s0 + $0x20] sm:$0xff]
    %v59 = vld [vmem:[%s0 + $0x28] sm:$0xff]
    %v60 = vld [vmem:[%s0 + $0x30] sm:$0xff]
    %v61 = vld [vmem:[%s0 + $0x38] sm:$0xff]
    %v62 = vpack.c.bf16 %v55, %v54
    %v63 = vpack.c.bf16 %v57, %v56
    %v64 = vpack.c.bf16 %v59, %v58
    %v65 = vpack.c.bf16 %v61, %v60
    %v66 = vld [vmem:[#allocation4] sm:$0xff]
    %v67 = vld [vmem:[#allocation4 + $0x8] sm:$0xff]
    %v68 = vld [vmem:[#allocation4 + $0x10] sm:$0xff]
    %v69 = vld [vmem:[#allocation4 + $0x18] sm:$0xff]
    %v70 = vld [vmem:[#allocation4 + $0x20] sm:$0xff]
    %v71 = vld [vmem:[#allocation4 + $0x28] sm:$0x77]
    %v72 = vld [vmem:[%s3] sm:$0x3]
    %v74 = vlaneseq
    %v75 = vshrl.u32 %v74, 7
    %v76 = vsub.s32 0, %v75
    %v77 = vrot.slane %v72, %v76
    %v78 = vlaneseq
    %v79 = vshrl.u32 %v78, 7
    %v80 = vsub.s32 1, %v79
    %v81 = vrot.slane %v72, %v80
    %v90 = vunpack.c.l.b16 %v66
    %v91 = vunpack.c.h.b16 %v66
    %v92 = vunpack.c.l.b16 %v67
    %v93 = vunpack.c.h.b16 %v67
    %v94 = vunpack.c.l.b16 %v68
    %v95 = vunpack.c.h.b16 %v68
    %v96 = vunpack.c.l.b16 %v69
    %v97 = vunpack.c.h.b16 %v69
    %v98 = vunpack.c.l.b16 %v70
    %v99 = vunpack.c.h.b16 %v70
    %v100 = vunpack.c.l.b16 %v71
    %v101 = vunpack.c.h.b16 %v71
    %v102 = vpack.c.b16 %v92, %v90
    %v103 = vpack.c.b16 %v93, %v91
    %v104 = vpack.c.b16 %v96, %v94
    %v105 = vpack.c.b16 %v97, %v95
    %v106 = vpack.c.b16 %v100, %v98
    %v107 = vpack.c.b16 %v101, %v99
    %vm112 = vcmask 375808
    %v114 = vsel %vm112, %v62, 0
    %v117 = vsel %vm112, %v63, 0
    %v120 = vsel %vm112, %v64, 0
    %v123 = vsel %vm112, %v65, 0
    %vm125 = vcmask 1046528
    %v127 = vsel %vm125, %v106, 0
    %v130 = vsel %vm125, %v107, 0
    %132 = vmatprep.subr.bf16.mxu0 %v103
    %133 = vmatpush1.bf16.msra.mxu0 %v102
    %134 = vmatprep.subr.bf16.mxu0 %v105
    %135 = vmatpush1.bf16.msra.mxu0 %v104
    %136 = vmatprep.subr.bf16.mxu0 %v130
    %137 = vmatpush1.bf16.msra.mxu0 %v127
    %138 = vmatprep.subr.bf16.mxu0 0
    %139 = vmatpush1.bf16.msra.mxu0 0
    %140 = vmatprep.subr.bf16.mxu0 0
    %141 = vmatpush1.bf16.msra.mxu0 0
    %142 = vmatprep.subr.bf16.mxu0 0
    %143 = vmatpush1.bf16.msra.mxu0 0
    %144 = vmatprep.subr.bf16.mxu0 0
    %145 = vmatpush1.bf16.msra.mxu0 0
    %146 = vmatprep.subr.bf16.mxu0 0
    %147 = vmatpush1.bf16.msra.mxu0 0
    %148 = vmatprep.subr.bf16.mxu0 0
    %149 = vmatpush1.bf16.msra.mxu0 0
    %150 = vmatprep.subr.bf16.mxu0 0
    %151 = vmatpush1.bf16.msra.mxu0 0
    %152 = vmatprep.subr.bf16.mxu0 0
    %153 = vmatpush1.bf16.msra.mxu0 0
    %154 = vmatprep.subr.bf16.mxu0 0
    %155 = vmatpush1.bf16.msra.mxu0 0
    %156 = vmatprep.subr.bf16.mxu0 0
    %157 = vmatpush1.bf16.msra.mxu0 0
    %158 = vmatprep.subr.bf16.mxu0 0
    %159 = vmatpush1.bf16.msra.mxu0 0
    %160 = vmatprep.subr.bf16.mxu0 0
    %161 = vmatpush1.bf16.msra.mxu0 0
    %162 = vmatprep.subr.bf16.mxu0 0
    %163 = vmatpush1.bf16.msra.mxu0 0
    %164 = vmatprep.mubr.bf16.mxu0 0
    %165 = vmatmul.mubr.bf16.gmra.mrb[0].mxu0 %v114
    %v166 = vpop.f32.mrb[0].mxu0
    %v167 = vadd.f32 %v77, %v166
    %v168 = vpop.f32.mrb[0].mxu0
    %v169 = vadd.f32 %v81, %v168
    %v170 = vpop.f32.mrb[0].mxu0
    %v171 = vadd.f32 %v77, %v170
    %v172 = vpop.f32.mrb[0].mxu0
    %v173 = vadd.f32 %v81, %v172
    %174 = vmatprep.mubr.bf16.mxu0 0
    %175 = vmatmul.mubr.bf16.gmra.mrb[0].mxu0 %v117
    %v176 = vpop.f32.mrb[0].mxu0
    %v177 = vadd.f32 %v77, %v176
    %v178 = vpop.f32.mrb[0].mxu0
    %v179 = vadd.f32 %v81, %v178
    %v180 = vpop.f32.mrb[0].mxu0
    %v181 = vadd.f32 %v77, %v180
    %v182 = vpop.f32.mrb[0].mxu0
    %v183 = vadd.f32 %v81, %v182
    %184 = vmatprep.mubr.bf16.mxu0 0
    %185 = vmatmul.mubr.bf16.gmra.mrb[0].mxu0 %v120
    %v186 = vpop.f32.mrb[0].mxu0
    %v187 = vadd.f32 %v77, %v186
    %v188 = vpop.f32.mrb[0].mxu0
    %v189 = vadd.f32 %v81, %v188
    %v190 = vpop.f32.mrb[0].mxu0
    %v191 = vadd.f32 %v77, %v190
    %v192 = vpop.f32.mrb[0].mxu0
    %v193 = vadd.f32 %v81, %v192
    %194 = vmatprep.mubr.bf16.mxu0 0
    %195 = vmatmul.mubr.bf16.gmra.mrb[0].mxu0 %v123
    %v196 = vpop.f32.mrb[0].mxu0
    %v197 = vadd.f32 %v77, %v196
    %v198 = vpop.f32.mrb[0].mxu0
    %v199 = vadd.f32 %v81, %v198
    %v200 = vpop.f32.mrb[0].mxu0
    %v201 = vadd.f32 %v77, %v200
    %v202 = vpop.f32.mrb[0].mxu0
    %v203 = vadd.f32 %v81, %v202
    %204 = vdwg.mxu0
    %205 = vst [vmem:[#allocation2] sm:$0xff] %v167
    %206 = vst [vmem:[#allocation2 + $0x8] sm:$0xff] %v169
    %207 = vst [vmem:[#allocation2 + $0x10] sm:$0xff] %v171
    %208 = vst [vmem:[#allocation2 + $0x18] sm:$0xff] %v173
    %209 = vst [vmem:[#allocation2 + $0x20] sm:$0xff] %v177
    %210 = vst [vmem:[#allocation2 + $0x28] sm:$0xff] %v179
    %211 = vst [vmem:[#allocation2 + $0x30] sm:$0xff] %v181
    %212 = vst [vmem:[#allocation2 + $0x38] sm:$0xff] %v183
    %213 = vst [vmem:[#allocation2 + $0x40] sm:$0xff] %v187
    %214 = vst [vmem:[#allocation2 + $0x48] sm:$0xff] %v189
    %215 = vst [vmem:[#allocation2 + $0x50] sm:$0xff] %v191
    %216 = vst [vmem:[#allocation2 + $0x58] sm:$0xff] %v193
    %217 = vst [vmem:[#allocation2 + $0x60] sm:$0xff] %v197
    %218 = vst [vmem:[#allocation2 + $0x68] sm:$0xff] %v199
    %219 = vst [vmem:[#allocation2 + $0x70] sm:$0xff] %v201
    %220 = vst [vmem:[#allocation2 + $0x78] sm:$0xff] %v203
    %v221 = vld [vmem:[#allocation6] sm:$0xff]
    %v222 = vld [vmem:[#allocation6 + $0x8] sm:$0xff]
    %v223 = vld [vmem:[#allocation6 + $0x10] sm:$0xff]
    %v224 = vld [vmem:[#allocation6 + $0x18] sm:$0xff]
    %v225 = vld [vmem:[#allocation6 + $0x20] sm:$0xff]
    %v226 = vld [vmem:[#allocation6 + $0x28] sm:$0xff]
    %v227 = vld [vmem:[#allocation6 + $0x30] sm:$0xff]
    %v228 = vld [vmem:[#allocation6 + $0x38] sm:$0xff]
    %v229 = vld [vmem:[#allocation2] sm:$0xff]
    %v230 = vld [vmem:[#allocation2 + $0x8] sm:$0xff]
    %v239 = vunpack.c.l.b16 %v221
    %v240 = vunpack.c.h.b16 %v221
    %v241 = vunpack.c.l.b16 %v222
    %v242 = vunpack.c.h.b16 %v222
    %v243 = vunpack.c.l.b16 %v223
    %v244 = vunpack.c.h.b16 %v223
    %v245 = vunpack.c.l.b16 %v224
    %v246 = vunpack.c.h.b16 %v224
    %v247 = vunpack.c.l.b16 %v225
    %v248 = vunpack.c.h.b16 %v225
    %v249 = vunpack.c.l.b16 %v226
    %v250 = vunpack.c.h.b16 %v226
    %v251 = vunpack.c.l.b16 %v227
    %v252 = vunpack.c.h.b16 %v227
    %v253 = vunpack.c.l.b16 %v228
    %v254 = vunpack.c.h.b16 %v228
    %v255 = vpack.c.b16 %v241, %v239
    %v256 = vpack.c.b16 %v242, %v240
    %v257 = vpack.c.b16 %v245, %v243
    %v258 = vpack.c.b16 %v246, %v244
    %v259 = vpack.c.b16 %v249, %v247
    %v260 = vpack.c.b16 %v250, %v248
    %v261 = vpack.c.b16 %v253, %v251
    %v262 = vpack.c.b16 %v254, %v252
    %vm271 = vcmask 523264
    %v273 = vsel %vm271, 0, 0
    %275 = vmatprep.subr.bf16.mxu0 %v256
    %276 = vmatpush1.bf16.msra.mxu0 %v255
    %277 = vmatprep.subr.bf16.mxu0 %v258
    %278 = vmatpush1.bf16.msra.mxu0 %v257
    %279 = vmatprep.subr.bf16.mxu0 %v260
    %280 = vmatpush1.bf16.msra.mxu0 %v259
    %281 = vmatprep.subr.bf16.mxu0 %v262
    %282 = vmatpush1.bf16.msra.mxu0 %v261
    %283 = vmatprep.subr.bf16.mxu0 0
    %284 = vmatpush1.bf16.msra.mxu0 0
    %285 = vmatprep.subr.bf16.mxu0 0
    %286 = vmatpush1.bf16.msra.mxu0 0
    %287 = vmatprep.subr.bf16.mxu0 0
    %288 = vmatpush1.bf16.msra.mxu0 0
    %289 = vmatprep.subr.bf16.mxu0 0
    %290 = vmatpush1.bf16.msra.mxu0 0
    %291 = vmatprep.subr.bf16.mxu0 0
    %292 = vmatpush1.bf16.msra.mxu0 0
    %293 = vmatprep.subr.bf16.mxu0 0
    %294 = vmatpush1.bf16.msra.mxu0 0
    %295 = vmatprep.subr.bf16.mxu0 0
    %296 = vmatpush1.bf16.msra.mxu0 0
    %297 = vmatprep.subr.bf16.mxu0 0
    %298 = vmatpush1.bf16.msra.mxu0 0
    %299 = vmatprep.subr.bf16.mxu0 0
    %300 = vmatpush1.bf16.msra.mxu0 0
    %301 = vmatprep.subr.bf16.mxu0 0
    %302 = vmatpush1.bf16.msra.mxu0 0
    %303 = vmatprep.subr.bf16.mxu0 0
    %304 = vmatpush1.bf16.msra.mxu0 0
    %305 = vmatprep.subr.bf16.mxu0 0
    %306 = vmatpush1.bf16.msra.mxu0 0
    %307 = vmatprep.mubr.bf16.mxu0 0
    %308 = vmatmul.mubr.bf16.gmra.mrb[0].mxu0 %v273
    %v309 = vpop.f32.mrb[0].mxu0
    %v310 = vadd.f32 0.0, %v309
    %v311 = vpop.f32.mrb[0].mxu0
    %v312 = vadd.f32 0.0, %v311
    %v313 = vpop.f32.mrb[0].mxu0
    %v314 = vpop.f32.mrb[0].mxu0
    %315 = vdwg.mxu0
    %v316 = vadd.f32 %v229, %v310
    %v317 = vadd.f32 %v230, %v312
    %v318 = vxor.u32 %v316, 2147483648
    %v319 = vxor.u32 %v317, 2147483648
    %v320 = vmul.f32 %v318, 1.442695
    %v321 = vpow.pop %v320
    %v322 = vmul.f32 %v319, 1.442695
    %v323 = vpow.pop %v322
    %v324 = vadd.f32 %v321, 1.0
    %v325 = vadd.f32 %v323, 1.0
    %v326 = vrcp.pop %v324
    %v327 = vmul.f32 1.0, %v326
    %v328 = vrcp.pop %v325
    %v329 = vmul.f32 1.0, %v328
    %v330 = vtanh.pop %v317
    %v331 = vmul.f32 %v327, 0.0
    %333 = vrot.lane.b32.xlu0 %v330, 64
    %v334 = vpop.permute.xlu0 %333
    %v336 = vmul.f32 %v327, %v334
    %338 = vrot.lane.b32.xlu0 %v336, 64
    %v339 = vpop.permute.xlu0 %338
    %v341 = vadd.f32 %v331, %v339
    %v342 = vtanh.pop %v341
    %344 = vrot.lane.b32.xlu0 %v342, 64
    %v345 = vpop.permute.xlu0 %344
    %v347 = vmul.f32 %v329, %v345
    %s348 = scalar_lea.vmem [#allocation2], 16
    %v349 = vld [vmem:[%s348] sm:$0xff]
    %v350 = vld [vmem:[%s348 + $0x8] sm:$0xff]
    %v351 = vpack.c.bf16 %v347, %v347
    %v353 = vsel %vm271, %v351, 0
    %355 = vmatprep.subr.bf16.mxu0 %v256
    %356 = vmatpush1.bf16.msra.mxu0 %v255
    %357 = vmatprep.subr.bf16.mxu0 %v258
    %358 = vmatpush1.bf16.msra.mxu0 %v257
    %359 = vmatprep.subr.bf16.mxu0 %v260
    %360 = vmatpush1.bf16.msra.mxu0 %v259
    %361 = vmatprep.subr.bf16.mxu0 %v262
    %362 = vmatpush1.bf16.msra.mxu0 %v261
    %363 = vmatprep.subr.bf16.mxu0 0
    %364 = vmatpush1.bf16.msra.mxu0 0
    %365 = vmatprep.subr.bf16.mxu0 0
    %366 = vmatpush1.bf16.msra.mxu0 0
    %367 = vmatprep.subr.bf16.mxu0 0
    %368 = vmatpush1.bf16.msra.mxu0 0
    %369 = vmatprep.subr.bf16.mxu0 0
    %370 = vmatpush1.bf16.msra.mxu0 0
    %371 = vmatprep.subr.bf16.mxu0 0
    %372 = vmatpush1.bf16.msra.mxu0 0
    %373 = vmatprep.subr.bf16.mxu0 0
    %374 = vmatpush1.bf16.msra.mxu0 0
    %375 = vmatprep.subr.bf16.mxu0 0
    %376 = vmatpush1.bf16.msra.mxu0 0
    %377 = vmatprep.subr.bf16.mxu0 0
    %378 = vmatpush1.bf16.msra.mxu0 0
    %379 = vmatprep.subr.bf16.mxu0 0
    %380 = vmatpush1.bf16.msra.mxu0 0
    %381 = vmatprep.subr.bf16.mxu0 0
    %382 = vmatpush1.bf16.msra.mxu0 0
    %383 = vmatprep.subr.bf16.mxu0 0
    %384 = vmatpush1.bf16.msra.mxu0 0
    %385 = vmatprep.subr.bf16.mxu0 0
    %386 = vmatpush1.bf16.msra.mxu0 0
    %387 = vmatprep.mubr.bf16.mxu0 0
    %388 = vmatmul.mubr.bf16.gmra.mrb[0].mxu0 %v353
    %v389 = vpop.f32.mrb[0].mxu0
    %v390 = vadd.f32 0.0, %v389
    %v391 = vpop.f32.mrb[0].mxu0
    %v392 = vadd.f32 0.0, %v391
    %v393 = vpop.f32.mrb[0].mxu0
    %v394 = vpop.f32.mrb[0].mxu0
    %395 = vdwg.mxu0
    %v396 = vadd.f32 %v349, %v390
    %v397 = vadd.f32 %v350, %v392
    %v398 = vxor.u32 %v396, 2147483648
    %v399 = vxor.u32 %v397, 2147483648
    %v400 = vmul.f32 %v398, 1.442695
    %v401 = vpow.pop %v400
    %v402 = vmul.f32 %v399, 1.442695
    %v403 = vpow.pop %v402
    %v404 = vadd.f32 %v401, 1.0
    %v405 = vadd.f32 %v403, 1.0
    %v406 = vrcp.pop %v404
    %v407 = vmul.f32 1.0, %v406
    %v408 = vrcp.pop %v405
    %v409 = vmul.f32 1.0, %v408
    %v410 = vtanh.pop %v397
    %v411 = vmul.f32 %v407, %v341
    %413 = vrot.lane.b32.xlu0 %v410, 64
    %v414 = vpop.permute.xlu0 %413
    %v416 = vmul.f32 %v407, %v414
    %418 = vrot.lane.b32.xlu0 %v416, 64
    %v419 = vpop.permute.xlu0 %418
    %v421 = vadd.f32 %v411, %v419
    %v422 = vtanh.pop %v421
    %424 = vrot.lane.b32.xlu0 %v422, 64
    %v425 = vpop.permute.xlu0 %424
    %v427 = vmul.f32 %v409, %v425
    %s428 = scalar_lea.vmem [#allocation2], 32
    %v429 = vld [vmem:[%s428] sm:$0xff]
    %v430 = vld [vmem:[%s428 + $0x8] sm:$0xff]
    %v431 = vpack.c.bf16 %v427, %v427
    %v433 = vsel %vm271, %v431, 0
    %435 = vmatprep.subr.bf16.mxu0 %v256
    %436 = vmatpush1.bf16.msra.mxu0 %v255
    %437 = vmatprep.subr.bf16.mxu0 %v258
    %438 = vmatpush1.bf16.msra.mxu0 %v257
    %439 = vmatprep.subr.bf16.mxu0 %v260
    %440 = vmatpush1.bf16.msra.mxu0 %v259
    %441 = vmatprep.subr.bf16.mxu0 %v262
    %442 = vmatpush1.bf16.msra.mxu0 %v261
    %443 = vmatprep.subr.bf16.mxu0 0
    %444 = vmatpush1.bf16.msra.mxu0 0
    %445 = vmatprep.subr.bf16.mxu0 0
    %446 = vmatpush1.bf16.msra.mxu0 0
    %447 = vmatprep.subr.bf16.mxu0 0
    %448 = vmatpush1.bf16.msra.mxu0 0
    %449 = vmatprep.subr.bf16.mxu0 0
    %450 = vmatpush1.bf16.msra.mxu0 0
    %451 = vmatprep.subr.bf16.mxu0 0
    %452 = vmatpush1.bf16.msra.mxu0 0
    %453 = vmatprep.subr.bf16.mxu0 0
    %454 = vmatpush1.bf16.msra.mxu0 0
    %455 = vmatprep.subr.bf16.mxu0 0
    %456 = vmatpush1.bf16.msra.mxu0 0
    %457 = vmatprep.subr.bf16.mxu0 0
    %458 = vmatpush1.bf16.msra.mxu0 0
    %459 = vmatprep.subr.bf16.mxu0 0
    %460 = vmatpush1.bf16.msra.mxu0 0
    %461 = vmatprep.subr.bf16.mxu0 0
    %462 = vmatpush1.bf16.msra.mxu0 0
    %463 = vmatprep.subr.bf16.mxu0 0
    %464 = vmatpush1.bf16.msra.mxu0 0
    %465 = vmatprep.subr.bf16.mxu0 0
    %466 = vmatpush1.bf16.msra.mxu0 0
    %467 = vmatprep.mubr.bf16.mxu0 0
    %468 = vmatmul.mubr.bf16.gmra.mrb[0].mxu0 %v433
    %v469 = vpop.f32.mrb[0].mxu0
    %v470 = vadd.f32 0.0, %v469
    %v471 = vpop.f32.mrb[0].mxu0
    %v472 = vadd.f32 0.0, %v471
    %v473 = vpop.f32.mrb[0].mxu0
    %v474 = vpop.f32.mrb[0].mxu0
    %475 = vdwg.mxu0
    %v476 = vadd.f32 %v429, %v470
    %v477 = vadd.f32 %v430, %v472
    %v478 = vxor.u32 %v476, 2147483648
    %v479 = vxor.u32 %v477, 2147483648
    %v480 = vmul.f32 %v478, 1.442695
    %v481 = vpow.pop %v480
    %v482 = vmul.f32 %v479, 1.442695
    %v483 = vpow.pop %v482
    %v484 = vadd.f32 %v481, 1.0
    %v485 = vadd.f32 %v483, 1.0
    %v486 = vrcp.pop %v484
    %v487 = vmul.f32 1.0, %v486
    %v488 = vrcp.pop %v485
    %v489 = vmul.f32 1.0, %v488
    %v490 = vtanh.pop %v477
    %v491 = vmul.f32 %v487, %v421
    %493 = vrot.lane.b32.xlu0 %v490, 64
    %v494 = vpop.permute.xlu0 %493
    %v496 = vmul.f32 %v487, %v494
    %498 = vrot.lane.b32.xlu0 %v496, 64
    %v499 = vpop.permute.xlu0 %498
    %v501 = vadd.f32 %v491, %v499
    %v502 = vtanh.pop %v501
    %504 = vrot.lane.b32.xlu0 %v502, 64
    %v505 = vpop.permute.xlu0 %504
    %v507 = vmul.f32 %v489, %v505
    %s508 = scalar_lea.vmem [#allocation2], 48
    %v509 = vld [vmem:[%s508] sm:$0xff]
    %v510 = vld [vmem:[%s508 + $0x8] sm:$0xff]
    %v511 = vpack.c.bf16 %v507, %v507
    %v513 = vsel %vm271, %v511, 0
    %515 = vmatprep.subr.bf16.mxu0 %v256
    %516 = vmatpush1.bf16.msra.mxu0 %v255
    %517 = vmatprep.subr.bf16.mxu0 %v258
    %518 = vmatpush1.bf16.msra.mxu0 %v257
    %519 = vmatprep.subr.bf16.mxu0 %v260
    %520 = vmatpush1.bf16.msra.mxu0 %v259
    %521 = vmatprep.subr.bf16.mxu0 %v262
    %522 = vmatpush1.bf16.msra.mxu0 %v261
    %523 = vmatprep.subr.bf16.mxu0 0
    %524 = vmatpush1.bf16.msra.mxu0 0
    %525 = vmatprep.subr.bf16.mxu0 0
    %526 = vmatpush1.bf16.msra.mxu0 0
    %527 = vmatprep.subr.bf16.mxu0 0
    %528 = vmatpush1.bf16.msra.mxu0 0
    %529 = vmatprep.subr.bf16.mxu0 0
    %530 = vmatpush1.bf16.msra.mxu0 0
    %531 = vmatprep.subr.bf16.mxu0 0
    %532 = vmatpush1.bf16.msra.mxu0 0
    %533 = vmatprep.subr.bf16.mxu0 0
    %534 = vmatpush1.bf16.msra.mxu0 0
    %535 = vmatprep.subr.bf16.mxu0 0
    %536 = vmatpush1.bf16.msra.mxu0 0
    %537 = vmatprep.subr.bf16.mxu0 0
    %538 = vmatpush1.bf16.msra.mxu0 0
    %539 = vmatprep.subr.bf16.mxu0 0
    %540 = vmatpush1.bf16.msra.mxu0 0
    %541 = vmatprep.subr.bf16.mxu0 0
    %542 = vmatpush1.bf16.msra.mxu0 0
    %543 = vmatprep.subr.bf16.mxu0 0
    %544 = vmatpush1.bf16.msra.mxu0 0
    %545 = vmatprep.subr.bf16.mxu0 0
    %546 = vmatpush1.bf16.msra.mxu0 0
    %547 = vmatprep.mubr.bf16.mxu0 0
    %548 = vmatmul.mubr.bf16.gmra.mrb[0].mxu0 %v513
    %v549 = vpop.f32.mrb[0].mxu0
    %v550 = vadd.f32 0.0, %v549
    %v551 = vpop.f32.mrb[0].mxu0
    %v552 = vadd.f32 0.0, %v551
    %v553 = vpop.f32.mrb[0].mxu0
    %v554 = vpop.f32.mrb[0].mxu0
    %555 = vdwg.mxu0
    %v556 = vadd.f32 %v509, %v550
    %v557 = vadd.f32 %v510, %v552
    %v558 = vxor.u32 %v556, 2147483648
    %v559 = vxor.u32 %v557, 2147483648
    %v560 = vmul.f32 %v558, 1.442695
    %v561 = vpow.pop %v560
    %v562 = vmul.f32 %v559, 1.442695
    %v563 = vpow.pop %v562
    %v564 = vadd.f32 %v561, 1.0
    %v565 = vadd.f32 %v563, 1.0
    %v566 = vrcp.pop %v564
    %v567 = vmul.f32 1.0, %v566
    %v568 = vrcp.pop %v565
    %v569 = vmul.f32 1.0, %v568
    %v570 = vtanh.pop %v557
    %v571 = vmul.f32 %v567, %v501
    %573 = vrot.lane.b32.xlu0 %v570, 64
    %v574 = vpop.permute.xlu0 %573
    %v576 = vmul.f32 %v567, %v574
    %578 = vrot.lane.b32.xlu0 %v576, 64
    %v579 = vpop.permute.xlu0 %578
    %v581 = vadd.f32 %v571, %v579
    %v582 = vtanh.pop %v581
    %584 = vrot.lane.b32.xlu0 %v582, 64
    %v585 = vpop.permute.xlu0 %584
    %v587 = vmul.f32 %v569, %v585
    %s588 = scalar_lea.vmem [#allocation2], 64
    %v589 = vld [vmem:[%s588] sm:$0xff]
    %v590 = vld [vmem:[%s588 + $0x8] sm:$0xff]
    %v591 = vpack.c.bf16 %v587, %v587
    %v593 = vsel %vm271, %v591, 0
    %595 = vmatprep.subr.bf16.mxu0 %v256
    %596 = vmatpush1.bf16.msra.mxu0 %v255
    %597 = vmatprep.subr.bf16.mxu0 %v258
    %598 = vmatpush1.bf16.msra.mxu0 %v257
    %599 = vmatprep.subr.bf16.mxu0 %v260
    %600 = vmatpush1.bf16.msra.mxu0 %v259
    %601 = vmatprep.subr.bf16.mxu0 %v262
    %602 = vmatpush1.bf16.msra.mxu0 %v261
    %603 = vmatprep.subr.bf16.mxu0 0
    %604 = vmatpush1.bf16.msra.mxu0 0
    %605 = vmatprep.subr.bf16.mxu0 0
    %606 = vmatpush1.bf16.msra.mxu0 0
    %607 = vmatprep.subr.bf16.mxu0 0
    %608 = vmatpush1.bf16.msra.mxu0 0
    %609 = vmatprep.subr.bf16.mxu0 0
    %610 = vmatpush1.bf16.msra.mxu0 0
    %611 = vmatprep.subr.bf16.mxu0 0
    %612 = vmatpush1.bf16.msra.mxu0 0
    %613 = vmatprep.subr.bf16.mxu0 0
    %614 = vmatpush1.bf16.msra.mxu0 0
    %615 = vmatprep.subr.bf16.mxu0 0
    %616 = vmatpush1.bf16.msra.mxu0 0
    %617 = vmatprep.subr.bf16.mxu0 0
    %618 = vmatpush1.bf16.msra.mxu0 0
    %619 = vmatprep.subr.bf16.mxu0 0
    %620 = vmatpush1.bf16.msra.mxu0 0
    %621 = vmatprep.subr.bf16.mxu0 0
    %622 = vmatpush1.bf16.msra.mxu0 0
    %623 = vmatprep.subr.bf16.mxu0 0
    %624 = vmatpush1.bf16.msra.mxu0 0
    %625 = vmatprep.subr.bf16.mxu0 0
    %626 = vmatpush1.bf16.msra.mxu0 0
    %627 = vmatprep.mubr.bf16.mxu0 0
    %628 = vmatmul.mubr.bf16.gmra.mrb[0].mxu0 %v593
    %v629 = vpop.f32.mrb[0].mxu0
    %v630 = vadd.f32 0.0, %v629
    %v631 = vpop.f32.mrb[0].mxu0
    %v632 = vadd.f32 0.0, %v631
    %v633 = vpop.f32.mrb[0].mxu0
    %v634 = vpop.f32.mrb[0].mxu0
    %635 = vdwg.mxu0
    %v636 = vadd.f32 %v589, %v630
    %v637 = vadd.f32 %v590, %v632
    %v638 = vxor.u32 %v636, 2147483648
    %v639 = vxor.u32 %v637, 2147483648
    %v640 = vmul.f32 %v638, 1.442695
    %v641 = vpow.pop %v640
    %v642 = vmul.f32 %v639, 1.442695
    %v643 = vpow.pop %v642
    %v644 = vadd.f32 %v641, 1.0
    %v645 = vadd.f32 %v643, 1.0
    %v646 = vrcp.pop %v644
    %v647 = vmul.f32 1.0, %v646
    %v648 = vrcp.pop %v645
    %v649 = vmul.f32 1.0, %v648
    %v650 = vtanh.pop %v637
    %v651 = vmul.f32 %v647, %v581
    %653 = vrot.lane.b32.xlu0 %v650, 64
    %v654 = vpop.permute.xlu0 %653
    %v656 = vmul.f32 %v647, %v654
    %658 = vrot.lane.b32.xlu0 %v656, 64
    %v659 = vpop.permute.xlu0 %658
    %v661 = vadd.f32 %v651, %v659
    %v662 = vtanh.pop %v661
    %664 = vrot.lane.b32.xlu0 %v662, 64
    %v665 = vpop.permute.xlu0 %664
    %v667 = vmul.f32 %v649, %v665
    %s668 = scalar_lea.vmem [#allocation2], 80
    %v669 = vld [vmem:[%s668] sm:$0xff]
    %v670 = vld [vmem:[%s668 + $0x8] sm:$0xff]
    %v671 = vpack.c.bf16 %v667, %v667
    %v673 = vsel %vm271, %v671, 0
    %675 = vmatprep.subr.bf16.mxu0 %v256
    %676 = vmatpush1.bf16.msra.mxu0 %v255
    %677 = vmatprep.subr.bf16.mxu0 %v258
    %678 = vmatpush1.bf16.msra.mxu0 %v257
    %679 = vmatprep.subr.bf16.mxu0 %v260
    %680 = vmatpush1.bf16.msra.mxu0 %v259
    %681 = vmatprep.subr.bf16.mxu0 %v262
    %682 = vmatpush1.bf16.msra.mxu0 %v261
    %683 = vmatprep.subr.bf16.mxu0 0
    %684 = vmatpush1.bf16.msra.mxu0 0
    %685 = vmatprep.subr.bf16.mxu0 0
    %686 = vmatpush1.bf16.msra.mxu0 0
    %687 = vmatprep.subr.bf16.mxu0 0
    %688 = vmatpush1.bf16.msra.mxu0 0
    %689 = vmatprep.subr.bf16.mxu0 0
    %690 = vmatpush1.bf16.msra.mxu0 0
    %691 = vmatprep.subr.bf16.mxu0 0
    %692 = vmatpush1.bf16.msra.mxu0 0
    %693 = vmatprep.subr.bf16.mxu0 0
    %694 = vmatpush1.bf16.msra.mxu0 0
    %695 = vmatprep.subr.bf16.mxu0 0
    %696 = vmatpush1.bf16.msra.mxu0 0
    %697 = vmatprep.subr.bf16.mxu0 0
    %698 = vmatpush1.bf16.msra.mxu0 0
    %699 = vmatprep.subr.bf16.mxu0 0
    %700 = vmatpush1.bf16.msra.mxu0 0
    %701 = vmatprep.subr.bf16.mxu0 0
    %702 = vmatpush1.bf16.msra.mxu0 0
    %703 = vmatprep.subr.bf16.mxu0 0
    %704 = vmatpush1.bf16.msra.mxu0 0
    %705 = vmatprep.subr.bf16.mxu0 0
    %706 = vmatpush1.bf16.msra.mxu0 0
    %707 = vmatprep.mubr.bf16.mxu0 0
    %708 = vmatmul.mubr.bf16.gmra.mrb[0].mxu0 %v673
    %v709 = vpop.f32.mrb[0].mxu0
    %v710 = vadd.f32 0.0, %v709
    %v711 = vpop.f32.mrb[0].mxu0
    %v712 = vadd.f32 0.0, %v711
    %v713 = vpop.f32.mrb[0].mxu0
    %v714 = vpop.f32.mrb[0].mxu0
    %715 = vdwg.mxu0
    %v716 = vadd.f32 %v669, %v710
    %v717 = vadd.f32 %v670, %v712
    %v718 = vxor.u32 %v716, 2147483648
    %v719 = vxor.u32 %v717, 2147483648
    %v720 = vmul.f32 %v718, 1.442695
    %v721 = vpow.pop %v720
    %v722 = vmul.f32 %v719, 1.442695
    %v723 = vpow.pop %v722
    %v724 = vadd.f32 %v721, 1.0
    %v725 = vadd.f32 %v723, 1.0
    %v726 = vrcp.pop %v724
    %v727 = vmul.f32 1.0, %v726
    %v728 = vrcp.pop %v725
    %v729 = vmul.f32 1.0, %v728
    %v730 = vtanh.pop %v717
    %v731 = vmul.f32 %v727, %v661
    %733 = vrot.lane.b32.xlu0 %v730, 64
    %v734 = vpop.permute.xlu0 %733
    %v736 = vmul.f32 %v727, %v734
    %738 = vrot.lane.b32.xlu0 %v736, 64
    %v739 = vpop.permute.xlu0 %738
    %v741 = vadd.f32 %v731, %v739
    %v742 = vtanh.pop %v741
    %744 = vrot.lane.b32.xlu0 %v742, 64
    %v745 = vpop.permute.xlu0 %744
    %v747 = vmul.f32 %v729, %v745
    %s748 = scalar_lea.vmem [#allocation2], 96
    %v749 = vld [vmem:[%s748] sm:$0xff]
    %v750 = vld [vmem:[%s748 + $0x8] sm:$0xff]
    %v751 = vpack.c.bf16 %v747, %v747
    %v753 = vsel %vm271, %v751, 0
    %755 = vmatprep.subr.bf16.mxu0 %v256
    %756 = vmatpush1.bf16.msra.mxu0 %v255
    %757 = vmatprep.subr.bf16.mxu0 %v258
    %758 = vmatpush1.bf16.msra.mxu0 %v257
    %759 = vmatprep.subr.bf16.mxu0 %v260
    %760 = vmatpush1.bf16.msra.mxu0 %v259
    %761 = vmatprep.subr.bf16.mxu0 %v262
    %762 = vmatpush1.bf16.msra.mxu0 %v261
    %763 = vmatprep.subr.bf16.mxu0 0
    %764 = vmatpush1.bf16.msra.mxu0 0
    %765 = vmatprep.subr.bf16.mxu0 0
    %766 = vmatpush1.bf16.msra.mxu0 0
    %767 = vmatprep.subr.bf16.mxu0 0
    %768 = vmatpush1.bf16.msra.mxu0 0
    %769 = vmatprep.subr.bf16.mxu0 0
    %770 = vmatpush1.bf16.msra.mxu0 0
    %771 = vmatprep.subr.bf16.mxu0 0
    %772 = vmatpush1.bf16.msra.mxu0 0
    %773 = vmatprep.subr.bf16.mxu0 0
    %774 = vmatpush1.bf16.msra.mxu0 0
    %775 = vmatprep.subr.bf16.mxu0 0
    %776 = vmatpush1.bf16.msra.mxu0 0
    %777 = vmatprep.subr.bf16.mxu0 0
    %778 = vmatpush1.bf16.msra.mxu0 0
    %779 = vmatprep.subr.bf16.mxu0 0
    %780 = vmatpush1.bf16.msra.mxu0 0
    %781 = vmatprep.subr.bf16.mxu0 0
    %782 = vmatpush1.bf16.msra.mxu0 0
    %783 = vmatprep.subr.bf16.mxu0 0
    %784 = vmatpush1.bf16.msra.mxu0 0
    %785 = vmatprep.subr.bf16.mxu0 0
    %786 = vmatpush1.bf16.msra.mxu0 0
    %787 = vmatprep.mubr.bf16.mxu0 0
    %788 = vmatmul.mubr.bf16.gmra.mrb[0].mxu0 %v753
    %v789 = vpop.f32.mrb[0].mxu0
    %v790 = vadd.f32 0.0, %v789
    %v791 = vpop.f32.mrb[0].mxu0
    %v792 = vadd.f32 0.0, %v791
    %v793 = vpop.f32.mrb[0].mxu0
    %v794 = vpop.f32.mrb[0].mxu0
    %795 = vdwg.mxu0
    %v796 = vadd.f32 %v749, %v790
    %v797 = vadd.f32 %v750, %v792
    %v798 = vxor.u32 %v796, 2147483648
    %v799 = vxor.u32 %v797, 2147483648
    %v800 = vmul.f32 %v798, 1.442695
    %v801 = vpow.pop %v800
    %v802 = vmul.f32 %v799, 1.442695
    %v803 = vpow.pop %v802
    %v804 = vadd.f32 %v801, 1.0
    %v805 = vadd.f32 %v803, 1.0
    %v806 = vrcp.pop %v804
    %v807 = vmul.f32 1.0, %v806
    %v808 = vrcp.pop %v805
    %v809 = vmul.f32 1.0, %v808
    %v810 = vtanh.pop %v797
    %v811 = vmul.f32 %v807, %v741
    %813 = vrot.lane.b32.xlu0 %v810, 64
    %v814 = vpop.permute.xlu0 %813
    %v816 = vmul.f32 %v807, %v814
    %818 = vrot.lane.b32.xlu0 %v816, 64
    %v819 = vpop.permute.xlu0 %818
    %v821 = vadd.f32 %v811, %v819
    %v822 = vtanh.pop %v821
    %824 = vrot.lane.b32.xlu0 %v822, 64
    %v825 = vpop.permute.xlu0 %824
    %v827 = vmul.f32 %v809, %v825
    %s828 = scalar_lea.vmem [#allocation2], 112
    %v829 = vld [vmem:[%s828] sm:$0xff]
    %v830 = vld [vmem:[%s828 + $0x8] sm:$0xff]
    %v831 = vpack.c.bf16 %v827, %v827
    %v833 = vsel %vm271, %v831, 0
    %835 = vmatprep.subr.bf16.mxu0 %v256
    %836 = vmatpush1.bf16.msra.mxu0 %v255
    %837 = vmatprep.subr.bf16.mxu0 %v258
    %838 = vmatpush1.bf16.msra.mxu0 %v257
    %839 = vmatprep.subr.bf16.mxu0 %v260
    %840 = vmatpush1.bf16.msra.mxu0 %v259
    %841 = vmatprep.subr.bf16.mxu0 %v262
    %842 = vmatpush1.bf16.msra.mxu0 %v261
    %843 = vmatprep.subr.bf16.mxu0 0
    %844 = vmatpush1.bf16.msra.mxu0 0
    %845 = vmatprep.subr.bf16.mxu0 0
    %846 = vmatpush1.bf16.msra.mxu0 0
    %847 = vmatprep.subr.bf16.mxu0 0
    %848 = vmatpush1.bf16.msra.mxu0 0
    %849 = vmatprep.subr.bf16.mxu0 0
    %850 = vmatpush1.bf16.msra.mxu0 0
    %851 = vmatprep.subr.bf16.mxu0 0
    %852 = vmatpush1.bf16.msra.mxu0 0
    %853 = vmatprep.subr.bf16.mxu0 0
    %854 = vmatpush1.bf16.msra.mxu0 0
    %855 = vmatprep.subr.bf16.mxu0 0
    %856 = vmatpush1.bf16.msra.mxu0 0
    %857 = vmatprep.subr.bf16.mxu0 0
    %858 = vmatpush1.bf16.msra.mxu0 0
    %859 = vmatprep.subr.bf16.mxu0 0
    %860 = vmatpush1.bf16.msra.mxu0 0
    %861 = vmatprep.subr.bf16.mxu0 0
    %862 = vmatpush1.bf16.msra.mxu0 0
    %863 = vmatprep.subr.bf16.mxu0 0
    %864 = vmatpush1.bf16.msra.mxu0 0
    %865 = vmatprep.subr.bf16.mxu0 0
    %866 = vmatpush1.bf16.msra.mxu0 0
    %867 = vmatprep.mubr.bf16.mxu0 0
    %868 = vmatmul.mubr.bf16.gmra.mrb[0].mxu0 %v833
    %v869 = vpop.f32.mrb[0].mxu0
    %v870 = vadd.f32 0.0, %v869
    %v871 = vpop.f32.mrb[0].mxu0
    %v872 = vadd.f32 0.0, %v871
    %v873 = vpop.f32.mrb[0].mxu0
    %v874 = vpop.f32.mrb[0].mxu0
    %875 = vdwg.mxu0
    %v876 = vadd.f32 %v829, %v870
    %v877 = vadd.f32 %v830, %v872
    %v878 = vxor.u32 %v876, 2147483648
    %v879 = vxor.u32 %v877, 2147483648
    %v880 = vmul.f32 %v878, 1.442695
    %v881 = vpow.pop %v880
    %v882 = vmul.f32 %v879, 1.442695
    %v883 = vpow.pop %v882
    %v884 = vadd.f32 %v881, 1.0
    %v885 = vadd.f32 %v883, 1.0
    %v886 = vrcp.pop %v884
    %v887 = vmul.f32 1.0, %v886
    %v888 = vrcp.pop %v885
    %v889 = vmul.f32 1.0, %v888
    %v890 = vtanh.pop %v877
    %v891 = vmul.f32 %v887, %v821
    %893 = vrot.lane.b32.xlu0 %v890, 64
    %v894 = vpop.permute.xlu0 %893
    %v896 = vmul.f32 %v887, %v894
    %898 = vrot.lane.b32.xlu0 %v896, 64
    %v899 = vpop.permute.xlu0 %898
    %v901 = vadd.f32 %v891, %v899
    %v902 = vtanh.pop %v901
    %904 = vrot.lane.b32.xlu0 %v902, 64
    %v905 = vpop.permute.xlu0 %904
    %v907 = vmul.f32 %v889, %v905
    %v908 = vld [vmem:[%s4] sm:$0xff]
    %v909 = vld [vmem:[%s4 + $0x8] sm:$0xff]
    %v910 = vld [vmem:[%s4 + $0x10] sm:$0xff]
    %v911 = vld [vmem:[%s4 + $0x18] sm:$0xff]
    %v912 = vld [vmem:[%s4 + $0x20] sm:$0xff]
    %v913 = vld [vmem:[%s4 + $0x28] sm:$0xff]
    %v914 = vld [vmem:[%s4 + $0x30] sm:$0xff]
    %v915 = vld [vmem:[%s4 + $0x38] sm:$0xff]
    %v916 = vld [vmem:[#allocation3] sm:$0x1]
    %v918 = vlaneseq
    %v919 = vshrl.u32 %v918, 7
    %v920 = vsub.s32 0, %v919
    %v921 = vrot.slane %v916, %v920
    %v924 = vsel %vm271, %v907, 0
    %926 = vmatprep.subr.mxu0 0.0
    %927 = vmatpush1.msra.mxu0 %v908
    %928 = vmatprep.subr.mxu0 0.0
    %929 = vmatpush1.msra.mxu0 %v909
    %930 = vmatprep.subr.mxu0 0.0
    %931 = vmatpush1.msra.mxu0 %v910
    %932 = vmatprep.subr.mxu0 0.0
    %933 = vmatpush1.msra.mxu0 %v911
    %934 = vmatprep.subr.mxu0 0.0
    %935 = vmatpush1.msra.mxu0 %v912
    %936 = vmatprep.subr.mxu0 0.0
    %937 = vmatpush1.msra.mxu0 %v913
    %938 = vmatprep.subr.mxu0 0.0
    %939 = vmatpush1.msra.mxu0 %v914
    %940 = vmatprep.subr.mxu0 0.0
    %941 = vmatpush1.msra.mxu0 %v915
    %942 = vmatprep.subr.mxu0 0.0
    %943 = vmatpush1.msra.mxu0 0.0
    %944 = vmatprep.subr.mxu0 0.0
    %945 = vmatpush1.msra.mxu0 0.0
    %946 = vmatprep.subr.mxu0 0.0
    %947 = vmatpush1.msra.mxu0 0.0
    %948 = vmatprep.subr.mxu0 0.0
    %949 = vmatpush1.msra.mxu0 0.0
    %950 = vmatprep.subr.mxu0 0.0
    %951 = vmatpush1.msra.mxu0 0.0
    %952 = vmatprep.subr.mxu0 0.0
    %953 = vmatpush1.msra.mxu0 0.0
    %954 = vmatprep.subr.mxu0 0.0
    %955 = vmatpush1.msra.mxu0 0.0
    %956 = vmatprep.subr.mxu0 0.0
    %957 = vmatpush1.msra.mxu0 0.0
    %958 = vmatprep.subr.mxu0 0.0
    %959 = vmatpush1.msra.mxu0 0.0
    %960 = vmatprep.subr.mxu0 0.0
    %961 = vmatpush1.msra.mxu0 0.0
    %962 = vmatprep.subr.mxu0 0.0
    %963 = vmatpush1.msra.mxu0 0.0
    %964 = vmatprep.subr.mxu0 0.0
    %965 = vmatpush1.msra.mxu0 0.0
    %966 = vmatprep.subr.mxu0 0.0
    %967 = vmatpush1.msra.mxu0 0.0
    %968 = vmatprep.subr.mxu0 0.0
    %969 = vmatpush1.msra.mxu0 0.0
    %970 = vmatprep.subr.mxu0 0.0
    %971 = vmatpush1.msra.mxu0 0.0
    %972 = vmatprep.subr.mxu0 0.0
    %973 = vmatpush1.msra.mxu0 0.0
    %974 = vmatprep.subr.mxu0 0.0
    %975 = vmatpush1.msra.mxu0 0.0
    %976 = vmatprep.subr.mxu0 0.0
    %977 = vmatpush1.msra.mxu0 0.0
    %978 = vmatprep.subr.mxu0 0.0
    %979 = vmatpush1.msra.mxu0 0.0
    %980 = vmatprep.subr.mxu0 0.0
    %981 = vmatpush1.msra.mxu0 0.0
    %982 = vmatprep.subr.mxu0 0.0
    %983 = vmatpush1.msra.mxu0 0.0
    %984 = vmatprep.subr.mxu0 0.0
    %985 = vmatpush1.msra.mxu0 0.0
    %986 = vmatprep.subr.mxu0 0.0
    %987 = vmatpush1.msra.mxu0 0.0
    %988 = vmatprep.subr.mxu0 0.0
    %989 = vmatpush1.msra.mxu0 0.0
    %990 = vmatprep.mubr.f32.mxu0 0.0
    %991 = vmatmul.mubr.f32.gmra.mrb[0].mxu0 %v924
    %v992 = vpop.f32.mrb[0].mxu0
    %v993 = vadd.f32 %v921, %v992
    %v994 = vpop.f32.mrb[0].mxu0
    %995 = vdwg.mxu0
    %vm996 = vcmask 7168
    %997 = vst.msk [vmem:[%s6] sm:$0xff] %vm996, %v993
    // Predicated region
    $region34: #{tpu_custom_call.1} parent=1 // pred_check
      _
    $region35: #{tpu_custom_call.1} parent=1 // pred_check_branch
      %999 = sbr.rel (0) target = $region37
    $region36: #{tpu_custom_call.1} parent=1 // pred_region
      _
    $region37: #{tpu_custom_call.1} parent=1 // pred_fallthru
      _
    // Predicated region
    $region38: #{tpu_custom_call.1} parent=1 // pred_check
      _
    $region39: #{tpu_custom_call.1} parent=1 // pred_check_branch
      %1001 = sbr.rel (0) target = $region41
    $region40: #{tpu_custom_call.1} parent=1 // pred_region
      _
    $region41: #{tpu_custom_call.1} parent=1 // pred_fallthru
      _
    %1002 = vsyncpa [#allocation5], 1
    %1003 = vsyncpa [#allocation7], 1

</llo_original>
